<compile_context>
chip_gen: v7x
topology: tpu7x:2x2x1
jax: 0.10.0
libtpu: 0.0.40
codegen_flags: <defaults>
</compile_context>

<pallas_src>
import functools
import math

import jax
import jax.numpy as jnp
from jax import lax
from jax.experimental import pallas as pl
from jax.experimental.pallas import tpu as pltpu


def _flash_attn_kernel(q_ref, k_ref, v_ref, o_ref,
                       qs_ref, m_ref, l_ref, acc_ref, *,
                       inv_scale, heads, d_key, d_value, tk,
                       lk_valid, mask_kv, exp_dtype):
    # q_ref:  (tq, G*Dk)   k_ref: (tk, G*Dk)   v_ref: (tk, G*Dv)
    # o_ref:  (tq, G*Dv)
    # qs_ref: (tq, G*Dk) scaled Q (input dtype)
    # m_ref/l_ref: (tq, G) f32    acc_ref: (tq, G*Dv) f32
    kv_step = pl.program_id(2)

    @pl.when(kv_step == 0)
    def _init():
        # Hoist the softmax scale out of the kv loop: scale Q once per q-tile.
        qs_ref[...] = (q_ref[...] * inv_scale).astype(qs_ref.dtype)
        m_ref[...] = jnp.full(m_ref.shape, -jnp.inf, jnp.float32)
        l_ref[...] = jnp.zeros(l_ref.shape, jnp.float32)
        acc_ref[...] = jnp.zeros(acc_ref.shape, jnp.float32)

    if mask_kv:
        col = kv_step * tk + lax.broadcasted_iota(jnp.int32, (1, tk), 1)
        kv_mask = col < lk_valid  # (1, tk), broadcasts over q rows

    # Process heads one at a time: only one (tq, tk) f32 score tile is live,
    # operands come from static lane slices of the lane-dense packed blocks.
    for h in range(heads):
        q_h = qs_ref[:, h * d_key:(h + 1) * d_key]        # (tq, Dk)
        k_h = k_ref[:, h * d_key:(h + 1) * d_key]         # (tk, Dk)
        v_h = v_ref[:, h * d_value:(h + 1) * d_value]     # (tk, Dv)

        # scores = (Q/sqrt(d)) K^T : contract feature dims (no XLU transpose).
        s = lax.dot_general(
            q_h, k_h,
            dimension_numbers=(((1,), (1,)), ((), ())),
            preferred_element_type=jnp.float32,
        )                                                 # (tq, tk) f32
        if mask_kv:
            s = jnp.where(kv_mask, s, -jnp.inf)

        # Online (streaming) softmax update across kv tiles.
        m_prev = m_ref[:, h:h + 1]                        # (tq, 1)
        m_new = jnp.maximum(m_prev, jnp.max(s, axis=-1, keepdims=True))
        alpha = jnp.exp(m_prev - m_new)                   # (tq, 1) f32

        p = jnp.exp((s - m_new).astype(exp_dtype))        # (tq, tk)
        l_ref[:, h:h + 1] = (
            alpha * l_ref[:, h:h + 1]
            + jnp.sum(p.astype(jnp.float32), axis=-1, keepdims=True))

        pv = lax.dot_general(
            p.astype(v_h.dtype), v_h,
            dimension_numbers=(((1,), (0,)), ((), ())),
            preferred_element_type=jnp.float32,
        )                                                 # (tq, Dv) f32
        acc_sl = acc_ref[:, h * d_value:(h + 1) * d_value]
        acc_ref[:, h * d_value:(h + 1) * d_value] = alpha * acc_sl + pv
        m_ref[:, h:h + 1] = m_new

    @pl.when(kv_step == pl.num_programs(2) - 1)
    def _finalize():
        l_all = l_ref[...]                                # (tq, G)
        inv_l = pl.reciprocal(l_all, approx=True)         # EUP slot
        inv_l = inv_l * (2.0 - l_all * inv_l)             # one Newton step
        # Per-head static lane-slice stores (no concat / XLU repack).
        for h in range(heads):
            out_h = (acc_ref[:, h * d_value:(h + 1) * d_value]
                     * inv_l[:, h:h + 1])
            o_ref[:, h * d_value:(h + 1) * d_value] = out_h.astype(o_ref.dtype)


def _round_up(x, m):
    return ((x + m - 1) // m) * m


def _sublane_pack(dtype):
    # f32 -> 8, bf16 -> 16, int8/fp8 -> 32 (packed sublane granularity).
    return max(8, 32 // jnp.dtype(dtype).itemsize)


def _vmem_capacity_bytes():
    try:
        cap = getattr(pltpu.get_tpu_info(), "vmem_capacity_bytes", None)
        if cap:
            return int(cap)
    except Exception:
        pass
    try:
        kind = jax.devices()[0].device_kind.lower()
        if "v7" in kind:
            return 64 * 1024 * 1024
        return 128 * 1024 * 1024
    except Exception:
        return 64 * 1024 * 1024  # conservative default


def _is_v5e():
    try:
        kind = jax.devices()[0].device_kind.lower()
        return ("v5 lite" in kind) or ("v5e" in kind) or ("v5lite" in kind)
    except Exception:
        return False


def _pick_head_group(num_bh, d_value):
    """Heads packed per grid step: enough to make the packed minor dim
    lane-dense (>=128) when D < 128; must divide the flattened head count."""
    if d_value >= 128:
        target = 1
    else:
        target = min(num_bh, 8, -(-128 // d_value))
    for g in range(target, 0, -1):
        if num_bh % g == 0:
            return g
    return 1


def scaled_dot_product_attention(query, key, value, d_key):
    """query: [B, H, Lq, Dk], key: [B, H, Lk, Dk], value: [B, H, Lk, Dv]."""
    B, H, Lq, Dk = query.shape
    Lk = key.shape[-2]
    Dv = value.shape[-1]
    BH = B * H
    dtype = query.dtype
    itemsize = jnp.dtype(dtype).itemsize
    pack = _sublane_pack(dtype)

    # Generation-aware tile caps / VMEM budget.
    vmem_cap = _vmem_capacity_bytes()
    if vmem_cap >= 100 * 1024 * 1024:        # v5e / v6e: 128 MiB VMEM
        q_tile_cap, kv_tile_cap = 512, 1024
    else:                                    # v7x: 64 MiB per TensorCore
        q_tile_cap, kv_tile_cap = 256, 512

    G = _pick_head_group(BH, Dv)

    def tile(length, cap):
        cap = max(pack, (cap // pack) * pack)
        return _round_up(length, pack) if length <= cap else cap

    tq = tile(Lq, q_tile_cap)
    tk = tile(Lk, kv_tile_cap)

    def n_q_blocks(t):
        return _round_up(Lq, t) // t

    # Megacore guard: keep >= 2 parallel grid blocks so both v7x TCs get work.
    if (BH // G) * n_q_blocks(tq) < 2:
        half = max(pack, _round_up(tq // 2, pack))
        if half < tq and n_q_blocks(half) >= 2:
            tq = half
        else:
            for g2 in range(G - 1, 0, -1):
                if BH % g2 == 0 and BH // g2 >= 2:
                    G = g2
                    break

    num_groups = BH // G
    Lq_pad = _round_up(Lq, tq)
    Lk_pad = _round_up(Lk, tk)
    n_q = Lq_pad // tq
    n_k = Lk_pad // tk
    mask_kv = (Lk_pad != Lk)

    def pack_heads(x, L, Lp, D):
        # [B, H, L, D] -> lane-dense [num_groups, Lp, G*D]
        x = x.reshape(BH, L, D)
        if Lp != L:
            x = jnp.pad(x, ((0, 0), (0, Lp - L), (0, 0)))
        x = x.reshape(num_groups, G, Lp, D)
        return jnp.transpose(x, (0, 2, 1, 3)).reshape(num_groups, Lp, G * D)

    q = pack_heads(query, Lq, Lq_pad, Dk)
    k = pack_heads(key, Lk, Lk_pad, Dk)
    v = pack_heads(value, Lk, Lk_pad, Dv)

    inv_scale = 1.0 / math.sqrt(float(d_key))  # torch.sqrt(FloatTensor([d_key]))
    # bf16 exp only for bf16 inputs on chips with a bf16 EUP path (v6e/v7x).
    exp_dtype = (jnp.bfloat16
                 if (dtype == jnp.bfloat16 and not _is_v5e())
                 else jnp.float32)

    kernel = functools.partial(
        _flash_attn_kernel,
        inv_scale=inv_scale, heads=G, d_key=Dk, d_value=Dv, tk=tk,
        lk_valid=Lk, mask_kv=mask_kv, exp_dtype=exp_dtype)

    grid = (num_groups, n_q, n_k)

    # VMEM budget: double-buffered lane-dense blocks + persistent scratch +
    # in-flight f32 score intermediates for a single head.
    q_blk = tq * G * Dk * itemsize
    k_blk = tk * G * Dk * itemsize
    v_blk = tk * G * Dv * itemsize
    o_blk = tq * G * Dv * itemsize
    blocks = 2 * (q_blk + k_blk + v_blk + o_blk)
    scratch = (tq * G * Dk * itemsize        # scaled Q
               + tq * G * Dv * 4             # accumulator
               + 2 * tq * 128 * 4)           # m, l (lane padded)
    live = 3 * tq * tk * 4                   # s, p, pv for one head
    est = blocks + scratch + live
    vmem_limit = int(min(max(2 * est, 8 * 1024 * 1024),
                         int(0.75 * vmem_cap)))

    out = pl.pallas_call(
        kernel,
        out_shape=jax.ShapeDtypeStruct((num_groups, Lq_pad, G * Dv), dtype),
        grid_spec=pltpu.PrefetchScalarGridSpec(
            num_scalar_prefetch=0,
            grid=grid,
            in_specs=[
                pl.BlockSpec((pl.Squeezed(), tq, G * Dk),
                             lambda g, qi, ki: (g, qi, 0)),
                pl.BlockSpec((pl.Squeezed(), tk, G * Dk),
                             lambda g, qi, ki: (g, ki, 0)),
                pl.BlockSpec((pl.Squeezed(), tk, G * Dv),
                             lambda g, qi, ki: (g, ki, 0)),
            ],
            out_specs=pl.BlockSpec((pl.Squeezed(), tq, G * Dv),
                                   lambda g, qi, ki: (g, qi, 0)),
            scratch_shapes=[
                pltpu.VMEM((tq, G * Dk), dtype),        # scaled Q
                pltpu.VMEM((tq, G), jnp.float32),       # running max
                pltpu.VMEM((tq, G), jnp.float32),       # running denominator
                pltpu.VMEM((tq, G * Dv), jnp.float32),  # output accumulator
            ],
        ),
        compiler_params=pltpu.CompilerParams(
            dimension_semantics=("parallel", "parallel", "arbitrary"),
            vmem_limit_bytes=vmem_limit,
        ),
    )(q, k, v)

    # Unpack lane-dense (G*Dv) blocks back to [B, H, Lq, Dv].
    out = out.reshape(num_groups, Lq_pad, G, Dv)
    out = jnp.transpose(out, (0, 2, 1, 3)).reshape(BH, Lq_pad, Dv)
    out = out[:, :Lq, :].reshape(B, H, Lq, Dv)
    return out
    # TODO(synk): if profiling shows exposed K/V DMA on v5e, add
    # pipeline_mode=pl.Buffered(3) to the K/V BlockSpecs (funded by the VMEM
    # freed by lane-dense packing).


if __name__ == "__main__":
    # Module constructor args (d_key, d_value, d_model) — only d_key matters
    # for the forward pass (the scale); there are no learned parameters.
    d_key, d_value, d_model = 32, 32, 32
    B, H, Lq, Lk = 2, 2, 8, 8

    root = jax.random.PRNGKey(0)
    kq, kk, kv = jax.random.split(root, 3)
    query = jax.random.normal(kq, (B, H, Lq, d_key), dtype=jnp.float32)
    key_t = jax.random.normal(kk, (B, H, Lk, d_key), dtype=jnp.float32)
    value = jax.random.normal(kv, (B, H, Lk, d_value), dtype=jnp.float32)

    out = scaled_dot_product_attention(query, key_t, value, d_key)
    out = jax.block_until_ready(out)

    # Plain-JAX reference.
    scores = jnp.einsum("bhqd,bhkd->bhqk", query, key_t) / jnp.sqrt(
        jnp.float32(d_key))
    ref = jnp.einsum("bhqk,bhkv->bhqv", jax.nn.softmax(scores, axis=-1), value)
    max_err = float(jnp.max(jnp.abs(out - ref)))
    assert jnp.allclose(out, ref, atol=1e-3, rtol=1e-3), f"max_err={max_err}"

    print("KERNEL_OK")
</pallas_src>

<mosaic_0001>
module attributes {stable_mosaic.version = 11 : i64} {
  func.func @_flash_attn_kernel(%arg0: i32, %arg1: i32, %arg2: i32, %arg3: memref<1x8x64xf32, #tpu.memory_space<vmem>>, %arg4: memref<1x8x64xf32, #tpu.memory_space<vmem>>, %arg5: memref<1x8x64xf32, #tpu.memory_space<vmem>>, %arg6: memref<1x8x64xf32, #tpu.memory_space<vmem>>, %arg7: memref<8x64xf32, #tpu.memory_space<vmem>>, %arg8: memref<8x2xf32, #tpu.memory_space<vmem>>, %arg9: memref<8x2xf32, #tpu.memory_space<vmem>>, %arg10: memref<8x64xf32, #tpu.memory_space<vmem>>) attributes {dimension_semantics = [#tpu.dimension_semantics<parallel>, #tpu.dimension_semantics<parallel>, #tpu.dimension_semantics<arbitrary>], iteration_bounds = array<i64: 2, 1, 1>, scalar_prefetch = 0 : i64, scratch_operands = 4 : i64, tpu.core_type = #tpu.core_type<tc>, window_params = [{transform_indices = @transform_0, window_bounds = array<i64: 1, 8, 64>}, {transform_indices = @transform_1, window_bounds = array<i64: 1, 8, 64>}, {transform_indices = @transform_2, window_bounds = array<i64: 1, 8, 64>}, {transform_indices = @transform_3, window_bounds = array<i64: 1, 8, 64>}]} {
    %c0_i32 = arith.constant 0 : i32
    %0 = arith.cmpi eq, %arg2, %c0_i32 : i32
    %1 = arith.extui %0 : i1 to i32
    %c0_i32_0 = arith.constant 0 : i32
    %2 = arith.cmpi ne, %1, %c0_i32_0 : i32
    scf.if %2 {
      %c0_47 = arith.constant 0 : index
      %c0_48 = arith.constant 0 : index
      %c0_49 = arith.constant 0 : index
      %62 = vector.load %arg3[%c0_47, %c0_48, %c0_49] : memref<1x8x64xf32, #tpu.memory_space<vmem>>, vector<1x8x64xf32>
      %63 = vector.shape_cast %62 : vector<1x8x64xf32> to vector<8x64xf32>
      %cst_50 = arith.constant 0.176776692 : f32
      %64 = vector.broadcast %cst_50 : f32 to vector<8x64xf32>
      %65 = arith.mulf %63, %64 : vector<8x64xf32>
      %c0_51 = arith.constant 0 : index
      %c0_52 = arith.constant 0 : index
      %66 = vector.load %arg7[%c0_51, %c0_52] : memref<8x64xf32, #tpu.memory_space<vmem>>, vector<8x64xf32>
      tpu.vector_store %arg7[%c0_51, %c0_52], %65 {strides = array<i32>} : memref<8x64xf32, #tpu.memory_space<vmem>>, vector<8x64xf32>,
      %cst_53 = arith.constant 0xFF800000 : f32
      %67 = vector.broadcast %cst_53 : f32 to vector<8x2xf32>
      %c0_54 = arith.constant 0 : index
      %c0_55 = arith.constant 0 : index
      %68 = vector.load %arg8[%c0_54, %c0_55] : memref<8x2xf32, #tpu.memory_space<vmem>>, vector<8x2xf32>
      tpu.vector_store %arg8[%c0_54, %c0_55], %67 {strides = array<i32>} : memref<8x2xf32, #tpu.memory_space<vmem>>, vector<8x2xf32>,
      %cst_56 = arith.constant 0.000000e+00 : f32
      %69 = vector.broadcast %cst_56 : f32 to vector<8x2xf32>
      %c0_57 = arith.constant 0 : index
      %c0_58 = arith.constant 0 : index
      %70 = vector.load %arg9[%c0_57, %c0_58] : memref<8x2xf32, #tpu.memory_space<vmem>>, vector<8x2xf32>
      tpu.vector_store %arg9[%c0_57, %c0_58], %69 {strides = array<i32>} : memref<8x2xf32, #tpu.memory_space<vmem>>, vector<8x2xf32>,
      %cst_59 = arith.constant 0.000000e+00 : f32
      %71 = vector.broadcast %cst_59 : f32 to vector<8x64xf32>
      %c0_60 = arith.constant 0 : index
      %c0_61 = arith.constant 0 : index
      %72 = vector.load %arg10[%c0_60, %c0_61] : memref<8x64xf32, #tpu.memory_space<vmem>>, vector<8x64xf32>
      tpu.vector_store %arg10[%c0_60, %c0_61], %71 {strides = array<i32>} : memref<8x64xf32, #tpu.memory_space<vmem>>, vector<8x64xf32>,
    } else {
    }
    %c0 = arith.constant 0 : index
    %c0_1 = arith.constant 0 : index
    %3 = vector.load %arg7[%c0, %c0_1] : memref<8x64xf32, #tpu.memory_space<vmem>>, vector<8x32xf32>
    %c0_2 = arith.constant 0 : index
    %c0_3 = arith.constant 0 : index
    %c0_4 = arith.constant 0 : index
    %4 = vector.load %arg4[%c0_2, %c0_3, %c0_4] : memref<1x8x64xf32, #tpu.memory_space<vmem>>, vector<1x8x32xf32>
    %5 = vector.shape_cast %4 : vector<1x8x32xf32> to vector<8x32xf32>
    %c0_5 = arith.constant 0 : index
    %c0_6 = arith.constant 0 : index
    %c0_7 = arith.constant 0 : index
    %6 = vector.load %arg5[%c0_5, %c0_6, %c0_7] : memref<1x8x64xf32, #tpu.memory_space<vmem>>, vector<1x8x32xf32>
    %7 = vector.shape_cast %6 : vector<1x8x32xf32> to vector<8x32xf32>
    %cst = arith.constant dense<0.000000e+00> : vector<8x8xf32>
    %8 = tpu.matmul %3, %5, %cst {dimension_numbers = #tpu.dot_dimension_numbers<[1], [1], [0], [0], [0, 0, 1, 0], [], []>} : vector<8x32xf32>, vector<8x32xf32>, vector<8x8xf32> -> vector<8x8xf32>
    %c0_8 = arith.constant 0 : index
    %c0_9 = arith.constant 0 : index
    %9 = vector.load %arg8[%c0_8, %c0_9] : memref<8x2xf32, #tpu.memory_space<vmem>>, vector<8x1xf32>
    %cst_10 = arith.constant dense<0xFF800000> : vector<8xf32>
    %10 = vector.multi_reduction <maximumf>, %8, %cst_10 [1] : vector<8x8xf32> to vector<8xf32>
    %11 = vector.shape_cast %10 : vector<8xf32> to vector<8x1xf32>
    %12 = arith.maximumf %9, %11 : vector<8x1xf32>
    %13 = arith.subf %9, %12 : vector<8x1xf32>
    %14 = math.exp %13 : vector<8x1xf32>
    %15 = vector.broadcast %12 : vector<8x1xf32> to vector<8x8xf32>
    %16 = arith.subf %8, %15 : vector<8x8xf32>
    %17 = math.exp %16 : vector<8x8xf32>
    %c0_11 = arith.constant 0 : index
    %c0_12 = arith.constant 0 : index
    %18 = vector.load %arg9[%c0_11, %c0_12] : memref<8x2xf32, #tpu.memory_space<vmem>>, vector<8x1xf32>
    %19 = arith.mulf %14, %18 : vector<8x1xf32>
    %cst_13 = arith.constant dense<0.000000e+00> : vector<8xf32>
    %20 = vector.multi_reduction <add>, %17, %cst_13 [1] : vector<8x8xf32> to vector<8xf32>
    %21 = vector.shape_cast %20 : vector<8xf32> to vector<8x1xf32>
    %22 = arith.addf %19, %21 : vector<8x1xf32>
    %c0_14 = arith.constant 0 : index
    %c0_15 = arith.constant 0 : index
    %23 = vector.load %arg9[%c0_14, %c0_15] : memref<8x2xf32, #tpu.memory_space<vmem>>, vector<8x1xf32>
    tpu.vector_store %arg9[%c0_14, %c0_15], %22 {strides = array<i32>} : memref<8x2xf32, #tpu.memory_space<vmem>>, vector<8x1xf32>,
    %cst_16 = arith.constant dense<0.000000e+00> : vector<8x32xf32>
    %24 = tpu.matmul %17, %7, %cst_16 {dimension_numbers = #tpu.dot_dimension_numbers<[1], [0], [0], [1], [0, 0, 1, 1], [], []>} : vector<8x8xf32>, vector<8x32xf32>, vector<8x32xf32> -> vector<8x32xf32>
    %c0_17 = arith.constant 0 : index
    %c0_18 = arith.constant 0 : index
    %25 = vector.load %arg10[%c0_17, %c0_18] : memref<8x64xf32, #tpu.memory_space<vmem>>, vector<8x32xf32>
    %26 = vector.broadcast %14 : vector<8x1xf32> to vector<8x32xf32>
    %27 = arith.mulf %26, %25 : vector<8x32xf32>
    %28 = arith.addf %27, %24 : vector<8x32xf32>
    %c0_19 = arith.constant 0 : index
    %c0_20 = arith.constant 0 : index
    %29 = vector.load %arg10[%c0_19, %c0_20] : memref<8x64xf32, #tpu.memory_space<vmem>>, vector<8x32xf32>
    tpu.vector_store %arg10[%c0_19, %c0_20], %28 {strides = array<i32>} : memref<8x64xf32, #tpu.memory_space<vmem>>, vector<8x32xf32>,
    %c0_21 = arith.constant 0 : index
    %c0_22 = arith.constant 0 : index
    %30 = vector.load %arg8[%c0_21, %c0_22] : memref<8x2xf32, #tpu.memory_space<vmem>>, vector<8x1xf32>
    tpu.vector_store %arg8[%c0_21, %c0_22], %12 {strides = array<i32>} : memref<8x2xf32, #tpu.memory_space<vmem>>, vector<8x1xf32>,
    %c0_23 = arith.constant 0 : index
    %c32 = arith.constant 32 : index
    %31 = vector.load %arg7[%c0_23, %c32] : memref<8x64xf32, #tpu.memory_space<vmem>>, vector<8x32xf32>
    %c0_24 = arith.constant 0 : index
    %c0_25 = arith.constant 0 : index
    %c32_26 = arith.constant 32 : index
    %32 = vector.load %arg4[%c0_24, %c0_25, %c32_26] : memref<1x8x64xf32, #tpu.memory_space<vmem>>, vector<1x8x32xf32>
    %33 = vector.shape_cast %32 : vector<1x8x32xf32> to vector<8x32xf32>
    %c0_27 = arith.constant 0 : index
    %c0_28 = arith.constant 0 : index
    %c32_29 = arith.constant 32 : index
    %34 = vector.load %arg5[%c0_27, %c0_28, %c32_29] : memref<1x8x64xf32, #tpu.memory_space<vmem>>, vector<1x8x32xf32>
    %35 = vector.shape_cast %34 : vector<1x8x32xf32> to vector<8x32xf32>
    %cst_30 = arith.constant dense<0.000000e+00> : vector<8x8xf32>
    %36 = tpu.matmul %31, %33, %cst_30 {dimension_numbers = #tpu.dot_dimension_numbers<[1], [1], [0], [0], [0, 0, 1, 0], [], []>} : vector<8x32xf32>, vector<8x32xf32>, vector<8x8xf32> -> vector<8x8xf32>
    %c0_31 = arith.constant 0 : index
    %c1 = arith.constant 1 : index
    %37 = vector.load %arg8[%c0_31, %c1] : memref<8x2xf32, #tpu.memory_space<vmem>>, vector<8x1xf32>
    %cst_32 = arith.constant dense<0xFF800000> : vector<8xf32>
    %38 = vector.multi_reduction <maximumf>, %36, %cst_32 [1] : vector<8x8xf32> to vector<8xf32>
    %39 = vector.shape_cast %38 : vector<8xf32> to vector<8x1xf32>
    %40 = arith.maximumf %37, %39 : vector<8x1xf32>
    %41 = arith.subf %37, %40 : vector<8x1xf32>
    %42 = math.exp %41 : vector<8x1xf32>
    %43 = vector.broadcast %40 : vector<8x1xf32> to vector<8x8xf32>
    %44 = arith.subf %36, %43 : vector<8x8xf32>
    %45 = math.exp %44 : vector<8x8xf32>
    %c0_33 = arith.constant 0 : index
    %c1_34 = arith.constant 1 : index
    %46 = vector.load %arg9[%c0_33, %c1_34] : memref<8x2xf32, #tpu.memory_space<vmem>>, vector<8x1xf32>
    %47 = arith.mulf %42, %46 : vector<8x1xf32>
    %cst_35 = arith.constant dense<0.000000e+00> : vector<8xf32>
    %48 = vector.multi_reduction <add>, %45, %cst_35 [1] : vector<8x8xf32> to vector<8xf32>
    %49 = vector.shape_cast %48 : vector<8xf32> to vector<8x1xf32>
    %50 = arith.addf %47, %49 : vector<8x1xf32>
    %c0_36 = arith.constant 0 : index
    %c1_37 = arith.constant 1 : index
    %51 = vector.load %arg9[%c0_36, %c1_37] : memref<8x2xf32, #tpu.memory_space<vmem>>, vector<8x1xf32>
    tpu.vector_store %arg9[%c0_36, %c1_37], %50 {strides = array<i32>} : memref<8x2xf32, #tpu.memory_space<vmem>>, vector<8x1xf32>,
    %cst_38 = arith.constant dense<0.000000e+00> : vector<8x32xf32>
    %52 = tpu.matmul %45, %35, %cst_38 {dimension_numbers = #tpu.dot_dimension_numbers<[1], [0], [0], [1], [0, 0, 1, 1], [], []>} : vector<8x8xf32>, vector<8x32xf32>, vector<8x32xf32> -> vector<8x32xf32>
    %c0_39 = arith.constant 0 : index
    %c32_40 = arith.constant 32 : index
    %53 = vector.load %arg10[%c0_39, %c32_40] : memref<8x64xf32, #tpu.memory_space<vmem>>, vector<8x32xf32>
    %54 = vector.broadcast %42 : vector<8x1xf32> to vector<8x32xf32>
    %55 = arith.mulf %54, %53 : vector<8x32xf32>
    %56 = arith.addf %55, %52 : vector<8x32xf32>
    %c0_41 = arith.constant 0 : index
    %c32_42 = arith.constant 32 : index
    %57 = vector.load %arg10[%c0_41, %c32_42] : memref<8x64xf32, #tpu.memory_space<vmem>>, vector<8x32xf32>
    tpu.vector_store %arg10[%c0_41, %c32_42], %56 {strides = array<i32>} : memref<8x64xf32, #tpu.memory_space<vmem>>, vector<8x32xf32>,
    %c0_43 = arith.constant 0 : index
    %c1_44 = arith.constant 1 : index
    %58 = vector.load %arg8[%c0_43, %c1_44] : memref<8x2xf32, #tpu.memory_space<vmem>>, vector<8x1xf32>
    tpu.vector_store %arg8[%c0_43, %c1_44], %40 {strides = array<i32>} : memref<8x2xf32, #tpu.memory_space<vmem>>, vector<8x1xf32>,
    %c0_i32_45 = arith.constant 0 : i32
    %59 = arith.cmpi eq, %arg2, %c0_i32_45 : i32
    %60 = arith.extui %59 : i1 to i32
    %c0_i32_46 = arith.constant 0 : i32
    %61 = arith.cmpi ne, %60, %c0_i32_46 : i32
    scf.if %61 {
      %c0_47 = arith.constant 0 : index
      %c0_48 = arith.constant 0 : index
      %62 = vector.load %arg9[%c0_47, %c0_48] : memref<8x2xf32, #tpu.memory_space<vmem>>, vector<8x2xf32>
      %63 = tpu.reciprocal %62 {approx = true} : vector<8x2xf32> -> vector<8x2xf32>
      %64 = arith.mulf %62, %63 : vector<8x2xf32>
      %cst_49 = arith.constant 2.000000e+00 : f32
      %65 = vector.broadcast %cst_49 : f32 to vector<8x2xf32>
      %66 = arith.subf %65, %64 : vector<8x2xf32>
      %67 = arith.mulf %63, %66 : vector<8x2xf32>
      %c0_50 = arith.constant 0 : index
      %c0_51 = arith.constant 0 : index
      %68 = vector.load %arg10[%c0_50, %c0_51] : memref<8x64xf32, #tpu.memory_space<vmem>>, vector<8x32xf32>
      %69 = vector.extract_strided_slice %67 {offsets = [0, 0], sizes = [8, 1], strides = [1, 1]} : vector<8x2xf32> to vector<8x1xf32>
      %70 = vector.broadcast %69 : vector<8x1xf32> to vector<8x32xf32>
      %71 = arith.mulf %68, %70 : vector<8x32xf32>
      %c0_52 = arith.constant 0 : index
      %c0_53 = arith.constant 0 : index
      %c0_54 = arith.constant 0 : index
      %72 = vector.load %arg6[%c0_52, %c0_53, %c0_54] : memref<1x8x64xf32, #tpu.memory_space<vmem>>, vector<1x8x32xf32>
      %73 = vector.shape_cast %72 : vector<1x8x32xf32> to vector<8x32xf32>
      %74 = vector.shape_cast %71 : vector<8x32xf32> to vector<1x8x32xf32>
      tpu.vector_store %arg6[%c0_52, %c0_53, %c0_54], %74 {strides = array<i32>} : memref<1x8x64xf32, #tpu.memory_space<vmem>>, vector<1x8x32xf32>,
      %c0_55 = arith.constant 0 : index
      %c32_56 = arith.constant 32 : index
      %75 = vector.load %arg10[%c0_55, %c32_56] : memref<8x64xf32, #tpu.memory_space<vmem>>, vector<8x32xf32>
      %76 = vector.extract_strided_slice %67 {offsets = [0, 1], sizes = [8, 1], strides = [1, 1]} : vector<8x2xf32> to vector<8x1xf32>
      %77 = vector.broadcast %76 : vector<8x1xf32> to vector<8x32xf32>
      %78 = arith.mulf %75, %77 : vector<8x32xf32>
      %c0_57 = arith.constant 0 : index
      %c0_58 = arith.constant 0 : index
      %c32_59 = arith.constant 32 : index
      %79 = vector.load %arg6[%c0_57, %c0_58, %c32_59] : memref<1x8x64xf32, #tpu.memory_space<vmem>>, vector<1x8x32xf32>
      %80 = vector.shape_cast %79 : vector<1x8x32xf32> to vector<8x32xf32>
      %81 = vector.shape_cast %78 : vector<8x32xf32> to vector<1x8x32xf32>
      tpu.vector_store %arg6[%c0_57, %c0_58, %c32_59], %81 {strides = array<i32>} : memref<1x8x64xf32, #tpu.memory_space<vmem>>, vector<1x8x32xf32>,
    } else {
    }
    return
  }
  func.func @transform_0(%arg0: i32, %arg1: i32, %arg2: i32) -> (i32, i32, i32) {
    %c0_i32 = arith.constant 0 : i32
    %c0_i32_0 = arith.constant 0 : i32
    return %arg0, %arg1, %c0_i32 : i32, i32, i32
  }
  func.func @transform_1(%arg0: i32, %arg1: i32, %arg2: i32) -> (i32, i32, i32) {
    %c0_i32 = arith.constant 0 : i32
    %c0_i32_0 = arith.constant 0 : i32
    return %arg0, %arg2, %c0_i32 : i32, i32, i32
  }
  func.func @transform_2(%arg0: i32, %arg1: i32, %arg2: i32) -> (i32, i32, i32) {
    %c0_i32 = arith.constant 0 : i32
    %c0_i32_0 = arith.constant 0 : i32
    return %arg0, %arg2, %c0_i32 : i32, i32, i32
  }
  func.func @transform_3(%arg0: i32, %arg1: i32, %arg2: i32) -> (i32, i32, i32) {
    %c0_i32 = arith.constant 0 : i32
    %c0_i32_0 = arith.constant 0 : i32
    return %arg0, %arg1, %c0_i32 : i32, i32, i32
  }
}

</mosaic_0001>

<llo_original>
// kernel: tpu_custom_call.1
$region0: #{tpu_custom_call.1}
  #allocation0 [shape = 'u32[]', space=smem, size = 0x4, offset = 0x4, fixed_abs, tag = 'smem constant byte address 0x4 - core index']
  #allocation1 [shape = 'u32[144,128]{1,0:T(1,128)}', space=vmem, size = 0x12000, scoped, tag = 'internal scratch']
  #allocation2 [shape = 'f32[8,64]{1,0:T(8,128)}', space=vmem, size = 0x1000, scoped, tag = 'scratch operand']
  #allocation3 [shape = 'f32[8,2]{1,0:T(8,128)}', space=vmem, size = 0x1000, scoped, tag = 'scratch operand']
  #allocation4 [shape = 'f32[8,2]{1,0:T(8,128)}', space=vmem, size = 0x1000, scoped, tag = 'scratch operand']
  #allocation5 [shape = 'f32[8,64]{1,0:T(8,128)}', space=vmem, size = 0x1000, scoped, tag = 'scratch operand']
  %s0 = inlined_call_operand.hbm [shape: f32[2,8,64], index: 0, kind: input, shape index: {}]
  %s1 = inlined_call_operand.hbm [shape: f32[2,8,64], index: 1, kind: input, shape index: {}]
  %s2 = inlined_call_operand.hbm [shape: f32[2,8,64], index: 2, kind: input, shape index: {}]
  %s3 = inlined_call_operand.hbm [shape: f32[2,8,64], index: 3, kind: output, shape index: {}]
  %s4 = sld [smem:[#allocation0]]
  $region65: #{tpu_custom_call.1} parent=0
    _
  %s6 = ssub.s32 1, %s4
  %s7 = scalar_select 0, %s6, %s4
  $region1: #{tpu_custom_call.1} parent=0
    #allocation6 [shape = 'u8[8192]{0}', space=vmem, size = 0x2000, scoped, tag = 'input window, operand 0']
    #allocation7 [shape = 's32[2]{0}', space=sflag, size = 0x8, scoped, tag = 'scoped memory for tpu_custom_call.1']
    #allocation8 [shape = 's32[2]{0}', space=sflag, size = 0x8, scoped, tag = 'scoped memory for tpu_custom_call.1']
    #allocation9 [shape = 'u8[8192]{0}', space=vmem, size = 0x2000, scoped, tag = 'input window, operand 1']
    #allocation10 [shape = 's32[2]{0}', space=sflag, size = 0x8, scoped, tag = 'scoped memory for tpu_custom_call.1']
    #allocation11 [shape = 'u8[8192]{0}', space=vmem, size = 0x2000, scoped, tag = 'input window, operand 2']
    #allocation12 [shape = 'u8[8192]{0}', space=vmem, size = 0x2000, scoped, tag = 'output window, operand 0']
    %8 = vsyncpa [#allocation7], 0
    %s9 = scalar_lea.sflag [#allocation7], 1
    %10 = vsyncpa %s9, 0
    %11 = vsyncpa [#allocation10], 0
    %s12 = scalar_lea.sflag [#allocation10], 1
    %13 = vsyncpa %s12, 0
    %14 = vsyncpa [#allocation8], 0
    %s15 = scalar_lea.sflag [#allocation8], 1
    %16 = vsyncpa %s15, 0
    loop: start=0, step=1, limit=4
    $region2: #{tpu_custom_call.1} parent=1 // loop_pre_header
      _
    $region3: #{tpu_custom_call.1} parent=1 // loop_header
      %s18 = sphi 0, %s22
      %p19 = scmp.ge.s32.totalorder %s18, 4
      %s25 = sphi 0, %s44
      %s26 = sphi 0, %s40
      %s27 = sphi 0, %s36
      %s28 = sphi 0, %s25
      %s29 = sphi 0, %s26
      %s30 = sphi 0, %s27
      %s31 = sphi 0, %s28
      %s32 = sphi 0, %s29
      %s33 = sphi 0, %s30
      %s49 = sphi 0, %s51
      %s52 = sphi 0, %s49
      %s53 = sphi 0, %s52
      %s69 = sphi 0, %s53
      %s77 = sphi 0, %s79
      %s80 = sphi 0, %s77
      %s81 = sphi 0, %s80
      %s97 = sphi 0, %s81
      %s105 = sphi 0, %s107
      %s108 = sphi 0, %s105
      %s109 = sphi 0, %s108
      %s125 = sphi 0, %s109
      %s133 = sphi 0, %s135
      %s136 = sphi 0, %s133
      %s137 = sphi 0, %s136
      %s153 = sphi 0, %s137
    $region4: #{tpu_custom_call.1} parent=1 // loop_header_branch
      %21 = sbr.rel (%p19) target = $region8
    $region5: #{tpu_custom_call.1} parent=1 // loop_body
      %s23 = ssub.s32 %s18, 1
      %s24 = ssub.s32 %s18, 2
      %s34 = sadd.s32 1, %s27
      %p35 = scmp.ge.s32.totalorder %s34, 1
      %s36 = scalar_select %p35, 0, %s34
      %s37 = sadd.s32 1, %s26
      %s38 = scalar_select %p35, %s37, %s26
      %p39 = scmp.ge.s32.totalorder %s38, 1
      %s40 = scalar_select %p39, 0, %s38
      %s41 = sadd.s32 1, %s25
      %s42 = scalar_select %p39, %s41, %s25
      %p43 = scmp.ge.s32.totalorder %s42, 2
      %s44 = scalar_select %p43, 0, %s42
      %s45 = ssub.s32 %s25, %s44
      %s46 = ssub.s32 %s26, %s40
      %s47 = sor.u32 %s45, %s46
      %p48 = scmp.eq.s32.totalorder %s47, 0
      %s50 = sadd.s32 %s49, 1
      %s51 = scalar_select %p48, %s49, %s50
      %p54 = pneg %p48
      %p55 = scmp.eq.s32.totalorder %s18, 1
      %p56 = por %p54, %p55
      %p57 = scmp.ne.s32.totalorder %s49, %s52
      %p58 = scmp.eq.s32.totalorder %s18, 0
      %p59 = por %p57, %p58
      %p60 = scmp.ne.s32.totalorder %s49, %s52
      %p61 = scmp.eq.s32.totalorder %s23, 1
      %p62 = por %p60, %p61
      %p63 = scmp.ne.s32.totalorder %s52, %s53
      %p64 = scmp.eq.s32.totalorder %s23, 0
      %p65 = por %p63, %p64
      %p66 = scmp.ne.s32.totalorder %s52, %s53
      %p67 = scmp.eq.s32.totalorder %s24, 1
      %p68 = por %p66, %p67
      %p70 = scmp.ne.s32.totalorder %s53, %s69
      %p71 = scmp.eq.s32.totalorder %s24, 0
      %p72 = por %p70, %p71
      %s73 = ssub.s32 %s25, %s44
      %s74 = ssub.s32 %s27, %s36
      %s75 = sor.u32 %s73, %s74
      %p76 = scmp.eq.s32.totalorder %s75, 0
      %s78 = sadd.s32 %s77, 1
      %s79 = scalar_select %p76, %s77, %s78
      %p82 = pneg %p76
      %p83 = scmp.eq.s32.totalorder %s18, 1
      %p84 = por %p82, %p83
      %p85 = scmp.ne.s32.totalorder %s77, %s80
      %p86 = scmp.eq.s32.totalorder %s18, 0
      %p87 = por %p85, %p86
      %p88 = scmp.ne.s32.totalorder %s77, %s80
      %p89 = scmp.eq.s32.totalorder %s23, 1
      %p90 = por %p88, %p89
      %p91 = scmp.ne.s32.totalorder %s80, %s81
      %p92 = scmp.eq.s32.totalorder %s23, 0
      %p93 = por %p91, %p92
      %p94 = scmp.ne.s32.totalorder %s80, %s81
      %p95 = scmp.eq.s32.totalorder %s24, 1
      %p96 = por %p94, %p95
      %p98 = scmp.ne.s32.totalorder %s81, %s97
      %p99 = scmp.eq.s32.totalorder %s24, 0
      %p100 = por %p98, %p99
      %s101 = ssub.s32 %s25, %s44
      %s102 = ssub.s32 %s27, %s36
      %s103 = sor.u32 %s101, %s102
      %p104 = scmp.eq.s32.totalorder %s103, 0
      %s106 = sadd.s32 %s105, 1
      %s107 = scalar_select %p104, %s105, %s106
      %p110 = pneg %p104
      %p111 = scmp.eq.s32.totalorder %s18, 1
      %p112 = por %p110, %p111
      %p113 = scmp.ne.s32.totalorder %s105, %s108
      %p114 = scmp.eq.s32.totalorder %s18, 0
      %p115 = por %p113, %p114
      %p116 = scmp.ne.s32.totalorder %s105, %s108
      %p117 = scmp.eq.s32.totalorder %s23, 1
      %p118 = por %p116, %p117
      %p119 = scmp.ne.s32.totalorder %s108, %s109
      %p120 = scmp.eq.s32.totalorder %s23, 0
      %p121 = por %p119, %p120
      %p122 = scmp.ne.s32.totalorder %s108, %s109
      %p123 = scmp.eq.s32.totalorder %s24, 1
      %p124 = por %p122, %p123
      %p126 = scmp.ne.s32.totalorder %s109, %s125
      %p127 = scmp.eq.s32.totalorder %s24, 0
      %p128 = por %p126, %p127
      %s129 = ssub.s32 %s25, %s44
      %s130 = ssub.s32 %s26, %s40
      %s131 = sor.u32 %s129, %s130
      %p132 = scmp.eq.s32.totalorder %s131, 0
      %s134 = sadd.s32 %s133, 1
      %s135 = scalar_select %p132, %s133, %s134
      %p138 = pneg %p132
      %p139 = scmp.eq.s32.totalorder %s18, 1
      %p140 = por %p138, %p139
      %p141 = scmp.ne.s32.totalorder %s133, %s136
      %p142 = scmp.eq.s32.totalorder %s18, 0
      %p143 = por %p141, %p142
      %p144 = scmp.ne.s32.totalorder %s133, %s136
      %p145 = scmp.eq.s32.totalorder %s23, 1
      %p146 = por %p144, %p145
      %p147 = scmp.ne.s32.totalorder %s136, %s137
      %p148 = scmp.eq.s32.totalorder %s23, 0
      %p149 = por %p147, %p148
      %p150 = scmp.ne.s32.totalorder %s136, %s137
      %p151 = scmp.eq.s32.totalorder %s24, 1
      %p152 = por %p150, %p151
      %p154 = scmp.ne.s32.totalorder %s137, %s153
      %p155 = scmp.eq.s32.totalorder %s24, 0
      %p156 = por %p154, %p155
      %p157 = scmp.le.s32.totalorder 1, %s18
      %p158 = scmp.lt.s32.totalorder %s18, 3
      %p159 = pnand %p157, %p158
      %p160 = pneg %p159
      // Predicated region
      $region9: #{tpu_custom_call.1} parent=5 // pred_check
        _
      $region10: #{tpu_custom_call.1} parent=5 // pred_check_branch
        %162 = sbr.rel (%p159) target = $region12
      $region11: #{tpu_custom_call.1} parent=5 // pred_region
        %s163 = ssub.s32 %s18, 1
      $region12: #{tpu_custom_call.1} parent=5 // pred_fallthru
        _
      %p164 = scmp.lt.s32.totalorder %s18, 2
      // Predicated region
      $region13: #{tpu_custom_call.1} parent=5 // pred_check
        %p165 = pneg %p164
      $region14: #{tpu_custom_call.1} parent=5 // pred_check_branch
        %167 = sbr.rel (%p165) target = $region16
      $region15: #{tpu_custom_call.1} parent=5 // pred_region
        // Predicated region
        $region17: #{tpu_custom_call.1} parent=15 // pred_check
          %p168 = pneg %p59
        $region18: #{tpu_custom_call.1} parent=15 // pred_check_branch
          %170 = sbr.rel (%p168) target = $region20
        $region19: #{tpu_custom_call.1} parent=15 // pred_region
          %s171 = sand.u32 %s49, 1
          %s172 = scalar_lea.sflag [#allocation7], %s171
          %s173 = sand.u32 %s49, 1
          %s174 = smul.addr %s173, 8
          %s175 = scalar_lea.vmem [#allocation6], %s174
          %s177 = ssub.s32 128, 128
          %178 = vsyncadd %s172, %s177
          %s179 = sadd.s32 %s26, %s25
          %s180 = smul.addr %s179, 128
          %s181 = scalar_lea.hbm %s0, %s180
          %s183 = sshll.u32 %s175, 4
          %s184 = int_to_ptr.vmem [resolvable:$true] %s183
          %186 = dma.hbm_to_vmem [thread:$0]  %s181, 128, %s184, %s172
        $region20: #{tpu_custom_call.1} parent=15 // pred_fallthru
          _
        // Predicated region
        $region21: #{tpu_custom_call.1} parent=15 // pred_check
          %p187 = pneg %p87
        $region22: #{tpu_custom_call.1} parent=15 // pred_check_branch
          %189 = sbr.rel (%p187) target = $region24
        $region23: #{tpu_custom_call.1} parent=15 // pred_region
          %s190 = sand.u32 %s18, 1
          %s191 = scalar_lea.sflag [#allocation10], %s190
          %s192 = sand.u32 %s77, 1
          %s193 = smul.addr %s192, 8
          %s194 = scalar_lea.vmem [#allocation9], %s193
          %s196 = ssub.s32 128, 128
          %197 = vsyncadd %s191, %s196
          %s198 = sadd.s32 %s27, %s25
          %s199 = smul.addr %s198, 128
          %s200 = scalar_lea.hbm %s1, %s199
          %s202 = sshll.u32 %s194, 4
          %s203 = int_to_ptr.vmem [resolvable:$true] %s202
          %205 = dma.hbm_to_vmem [thread:$0]  %s200, 128, %s203, %s191
        $region24: #{tpu_custom_call.1} parent=15 // pred_fallthru
          _
        // Predicated region
        $region25: #{tpu_custom_call.1} parent=15 // pred_check
          %p206 = pneg %p115
        $region26: #{tpu_custom_call.1} parent=15 // pred_check_branch
          %208 = sbr.rel (%p206) target = $region28
        $region27: #{tpu_custom_call.1} parent=15 // pred_region
          %s209 = sand.u32 %s18, 1
          %s210 = scalar_lea.sflag [#allocation10], %s209
          %s211 = sand.u32 %s105, 1
          %s212 = smul.addr %s211, 8
          %s213 = scalar_lea.vmem [#allocation11], %s212
          %s215 = ssub.s32 128, 128
          %216 = vsyncadd %s210, %s215
          %s217 = sadd.s32 %s27, %s25
          %s218 = smul.addr %s217, 128
          %s219 = scalar_lea.hbm %s2, %s218
          %s221 = sshll.u32 %s213, 4
          %s222 = int_to_ptr.vmem [resolvable:$true] %s221
          %224 = dma.hbm_to_vmem [thread:$0]  %s219, 128, %s222, %s210
        $region28: #{tpu_custom_call.1} parent=15 // pred_fallthru
          _
      $region16: #{tpu_custom_call.1} parent=5 // pred_fallthru
        _
      %p225 = scmp.le.s32.totalorder 1, %s18
      %p226 = scmp.lt.s32.totalorder %s18, 3
      %p227 = pnand %p225, %p226
      %p228 = pneg %p227
      // Predicated region
      $region29: #{tpu_custom_call.1} parent=5 // pred_check
        _
      $region30: #{tpu_custom_call.1} parent=5 // pred_check_branch
        %230 = sbr.rel (%p227) target = $region32
      $region31: #{tpu_custom_call.1} parent=5 // pred_region
        %s231 = ssub.s32 %s18, 1
        %s232 = sand.u32 %s52, 1
        %s233 = scalar_lea.sflag [#allocation7], %s232
        %s234 = sand.u32 %s52, 1
        %s235 = smul.addr %s234, 8
        %s236 = scalar_lea.vmem [#allocation6], %s235
        // Predicated region
        $region33: #{tpu_custom_call.1} parent=31 // pred_check
          %p237 = pneg %p65
        $region34: #{tpu_custom_call.1} parent=31 // pred_check_branch
          %239 = sbr.rel (%p237) target = $region36
        $region35: #{tpu_custom_call.1} parent=31 // pred_region
          %240 = dma.done %s233, 128
        $region36: #{tpu_custom_call.1} parent=31 // pred_fallthru
          _
        %s241 = sand.u32 %s23, 1
        %s242 = scalar_lea.sflag [#allocation10], %s241
        %s243 = sand.u32 %s80, 1
        %s244 = smul.addr %s243, 8
        %s245 = scalar_lea.vmem [#allocation9], %s244
        // Predicated region
        $region37: #{tpu_custom_call.1} parent=31 // pred_check
          %p246 = pneg %p93
        $region38: #{tpu_custom_call.1} parent=31 // pred_check_branch
          %248 = sbr.rel (%p246) target = $region40
        $region39: #{tpu_custom_call.1} parent=31 // pred_region
          %249 = dma.done %s242, 128
        $region40: #{tpu_custom_call.1} parent=31 // pred_fallthru
          _
        %s250 = sand.u32 %s23, 1
        %s251 = scalar_lea.sflag [#allocation10], %s250
        %s252 = sand.u32 %s108, 1
        %s253 = smul.addr %s252, 8
        %s254 = scalar_lea.vmem [#allocation11], %s253
        // Predicated region
        $region41: #{tpu_custom_call.1} parent=31 // pred_check
          %p255 = pneg %p121
        $region42: #{tpu_custom_call.1} parent=31 // pred_check_branch
          %257 = sbr.rel (%p255) target = $region44
        $region43: #{tpu_custom_call.1} parent=31 // pred_region
          %258 = dma.done %s251, 128
        $region44: #{tpu_custom_call.1} parent=31 // pred_fallthru
          _
        %s259 = sand.u32 %s52, 1
        %s260 = scalar_lea.sflag [#allocation7], %s259
        %s261 = sand.u32 %s52, 1
        %s262 = smul.addr %s261, 8
        %s263 = scalar_lea.vmem [#allocation6], %s262
        %p264 = pneg %p65
        %p265 = pneg %p62
        %s266 = sand.u32 %s23, 1
        %s267 = scalar_lea.sflag [#allocation10], %s266
        %s268 = sand.u32 %s80, 1
        %s269 = smul.addr %s268, 8
        %s270 = scalar_lea.vmem [#allocation9], %s269
        %p271 = pneg %p93
        %p272 = pneg %p90
        %s273 = sand.u32 %s23, 1
        %s274 = scalar_lea.sflag [#allocation10], %s273
        %s275 = sand.u32 %s108, 1
        %s276 = smul.addr %s275, 8
        %s277 = scalar_lea.vmem [#allocation11], %s276
        %p278 = pneg %p121
        %p279 = pneg %p118
        %p280 = pneg %p149
        %p281 = pneg %p146
        %s282 = sand.u32 %s136, 1
        %s283 = scalar_lea.sflag [#allocation8], %s282
        %s284 = sand.u32 %s136, 1
        %s285 = smul.addr %s284, 8
        %s286 = scalar_lea.vmem [#allocation12], %s285
        %p287 = scmp.eq.s32.totalorder %s30, 0
        // Predicated region
        $region45: #{tpu_custom_call.1} parent=31 // pred_check
          %p288 = pneg %p287
        $region46: #{tpu_custom_call.1} parent=31 // pred_check_branch
          %290 = sbr.rel (%p288) target = $region48
        $region47: #{tpu_custom_call.1} parent=31 // pred_region
          %v291 = vld [vmem:[%s236] sm:$0xff]
          %v292 = vmul.f32 %v291, 0.17677669
          %vm293 = vcmask 523264
          %294 = vst.msk [vmem:[#allocation2] sm:$0xff] %vm293, %v292
          %vm295 = vcmask 15360
          %296 = vst.msk [vmem:[#allocation3] sm:$0xff] %vm295, -inf
          %297 = vst.msk [vmem:[#allocation4] sm:$0xff] %vm295, 0.0
          %298 = vst.msk [vmem:[#allocation5] sm:$0xff] %vm293, 0.0
        $region48: #{tpu_custom_call.1} parent=31 // pred_fallthru
          _
        %v299 = vld [vmem:[#allocation2] sm:$0xff]
        %v300 = vld [vmem:[%s245] sm:$0xff]
        %v301 = vld [vmem:[%s254] sm:$0xff]
        %vm302 = vcmask 261120
        %v304 = vsel %vm302, %v299, 0
        %v307 = vsel %vm302, %v300, 0
        %309 = vmatprep.subr.mxu0 0.0
        %310 = vmatpush1.xpose.msra.mxu0 %v307
        %311 = vmatprep.subr.mxu0 0.0
        %312 = vmatpush1.xpose.msra.mxu0 0.0
        %313 = vmatprep.subr.mxu0 0.0
        %314 = vmatpush1.xpose.msra.mxu0 0.0
        %315 = vmatprep.subr.mxu0 0.0
        %316 = vmatpush1.xpose.msra.mxu0 0.0
        %317 = vmatprep.subr.mxu0 0.0
        %318 = vmatpush1.xpose.msra.mxu0 0.0
        %319 = vmatprep.subr.mxu0 0.0
        %320 = vmatpush1.xpose.msra.mxu0 0.0
        %321 = vmatprep.subr.mxu0 0.0
        %322 = vmatpush1.xpose.msra.mxu0 0.0
        %323 = vmatprep.subr.mxu0 0.0
        %324 = vmatpush1.xpose.msra.mxu0 0.0
        %325 = vmatprep.subr.mxu0 0.0
        %326 = vmatpush1.xpose.msra.mxu0 0.0
        %327 = vmatprep.subr.mxu0 0.0
        %328 = vmatpush1.xpose.msra.mxu0 0.0
        %329 = vmatprep.subr.mxu0 0.0
        %330 = vmatpush1.xpose.msra.mxu0 0.0
        %331 = vmatprep.subr.mxu0 0.0
        %332 = vmatpush1.xpose.msra.mxu0 0.0
        %333 = vmatprep.subr.mxu0 0.0
        %334 = vmatpush1.xpose.msra.mxu0 0.0
        %335 = vmatprep.subr.mxu0 0.0
        %336 = vmatpush1.xpose.msra.mxu0 0.0
        %337 = vmatprep.subr.mxu0 0.0
        %338 = vmatpush1.xpose.msra.mxu0 0.0
        %339 = vmatprep.subr.mxu0 0.0
        %340 = vmatpush1.xpose.msra.mxu0 0.0
        %341 = vmatprep.subr.mxu0 0.0
        %342 = vmatpush1.xpose.msra.mxu0 0.0
        %343 = vmatprep.subr.mxu0 0.0
        %344 = vmatpush1.xpose.msra.mxu0 0.0
        %345 = vmatprep.subr.mxu0 0.0
        %346 = vmatpush1.xpose.msra.mxu0 0.0
        %347 = vmatprep.subr.mxu0 0.0
        %348 = vmatpush1.xpose.msra.mxu0 0.0
        %349 = vmatprep.subr.mxu0 0.0
        %350 = vmatpush1.xpose.msra.mxu0 0.0
        %351 = vmatprep.subr.mxu0 0.0
        %352 = vmatpush1.xpose.msra.mxu0 0.0
        %353 = vmatprep.subr.mxu0 0.0
        %354 = vmatpush1.xpose.msra.mxu0 0.0
        %355 = vmatprep.subr.mxu0 0.0
        %356 = vmatpush1.xpose.msra.mxu0 0.0
        %357 = vmatprep.subr.mxu0 0.0
        %358 = vmatpush1.xpose.msra.mxu0 0.0
        %359 = vmatprep.subr.mxu0 0.0
        %360 = vmatpush1.xpose.msra.mxu0 0.0
        %361 = vmatprep.subr.mxu0 0.0
        %362 = vmatpush1.xpose.msra.mxu0 0.0
        %363 = vmatprep.subr.mxu0 0.0
        %364 = vmatpush1.xpose.msra.mxu0 0.0
        %365 = vmatprep.subr.mxu0 0.0
        %366 = vmatpush1.xpose.msra.mxu0 0.0
        %367 = vmatprep.subr.mxu0 0.0
        %368 = vmatpush1.xpose.msra.mxu0 0.0
        %369 = vmatprep.subr.mxu0 0.0
        %370 = vmatpush1.xpose.msra.mxu0 0.0
        %371 = vmatprep.subr.mxu0 0.0
        %372 = vmatpush1.xpose.msra.mxu0 0.0
        %373 = vmatprep.mubr.f32.mxu0 0.0
        %374 = vmatmul.mubr.f32.gmra.mrb[0].mxu0 %v304
        %v375 = vpop.f32.mrb[0].mxu0
        %v376 = vadd.f32 0.0, %v375
        %v377 = vpop.f32.mrb[0].mxu0
        %378 = vdwg.mxu0
        %v379 = vld [vmem:[#allocation3] sm:$0xff]
        %vm380 = vcmask 64512
        %v381 = vsel %vm380, %v376, -inf
        %382 = vmax.xlane.f32.xlu0 %v381
        %v383 = vpop.xlane.xlu0 %382
        %v384 = vmax.f32 %v379, %v383
        %v385 = vsub.f32 %v379, %v384
        %v386 = vmul.f32 %v385, 1.442695
        %v387 = vpow.pop %v386
        %389 = vset.pattern.permute.xlu0 0
        %390 = vperm.xlu0 %389, %v384
        %v391 = vpop.permute.xlu0 %390
        %v393 = vsub.f32 %v376, %v391
        %v394 = vmul.f32 %v393, 1.442695
        %v395 = vpow.pop %v394
        %v396 = vld [vmem:[#allocation4] sm:$0xff]
        %v397 = vmul.f32 %v387, %v396
        %v398 = vsel %vm380, %v395, 0.0
        %399 = vadd.xlane.f32.xlu0 %v398
        %v400 = vpop.xlane.xlu0 %399
        %v401 = vadd.f32 %v397, %v400
        %vm402 = vcmask 7168
        %403 = vst.msk [vmem:[#allocation4] sm:$0xff] %vm402, %v401
        %v405 = vsel %vm380, %v395, 0
        %407 = vmatprep.subr.mxu0 0.0
        %408 = vmatpush1.msra.mxu0 %v301
        %409 = vmatprep.subr.mxu0 0.0
        %410 = vmatpush1.msra.mxu0 0.0
        %411 = vmatprep.subr.mxu0 0.0
        %412 = vmatpush1.msra.mxu0 0.0
        %413 = vmatprep.subr.mxu0 0.0
        %414 = vmatpush1.msra.mxu0 0.0
        %415 = vmatprep.subr.mxu0 0.0
        %416 = vmatpush1.msra.mxu0 0.0
        %417 = vmatprep.subr.mxu0 0.0
        %418 = vmatpush1.msra.mxu0 0.0
        %419 = vmatprep.subr.mxu0 0.0
        %420 = vmatpush1.msra.mxu0 0.0
        %421 = vmatprep.subr.mxu0 0.0
        %422 = vmatpush1.msra.mxu0 0.0
        %423 = vmatprep.subr.mxu0 0.0
        %424 = vmatpush1.msra.mxu0 0.0
        %425 = vmatprep.subr.mxu0 0.0
        %426 = vmatpush1.msra.mxu0 0.0
        %427 = vmatprep.subr.mxu0 0.0
        %428 = vmatpush1.msra.mxu0 0.0
        %429 = vmatprep.subr.mxu0 0.0
        %430 = vmatpush1.msra.mxu0 0.0
        %431 = vmatprep.subr.mxu0 0.0
        %432 = vmatpush1.msra.mxu0 0.0
        %433 = vmatprep.subr.mxu0 0.0
        %434 = vmatpush1.msra.mxu0 0.0
        %435 = vmatprep.subr.mxu0 0.0
        %436 = vmatpush1.msra.mxu0 0.0
        %437 = vmatprep.subr.mxu0 0.0
        %438 = vmatpush1.msra.mxu0 0.0
        %439 = vmatprep.subr.mxu0 0.0
        %440 = vmatpush1.msra.mxu0 0.0
        %441 = vmatprep.subr.mxu0 0.0
        %442 = vmatpush1.msra.mxu0 0.0
        %443 = vmatprep.subr.mxu0 0.0
        %444 = vmatpush1.msra.mxu0 0.0
        %445 = vmatprep.subr.mxu0 0.0
        %446 = vmatpush1.msra.mxu0 0.0
        %447 = vmatprep.subr.mxu0 0.0
        %448 = vmatpush1.msra.mxu0 0.0
        %449 = vmatprep.subr.mxu0 0.0
        %450 = vmatpush1.msra.mxu0 0.0
        %451 = vmatprep.subr.mxu0 0.0
        %452 = vmatpush1.msra.mxu0 0.0
        %453 = vmatprep.subr.mxu0 0.0
        %454 = vmatpush1.msra.mxu0 0.0
        %455 = vmatprep.subr.mxu0 0.0
        %456 = vmatpush1.msra.mxu0 0.0
        %457 = vmatprep.subr.mxu0 0.0
        %458 = vmatpush1.msra.mxu0 0.0
        %459 = vmatprep.subr.mxu0 0.0
        %460 = vmatpush1.msra.mxu0 0.0
        %461 = vmatprep.subr.mxu0 0.0
        %462 = vmatpush1.msra.mxu0 0.0
        %463 = vmatprep.subr.mxu0 0.0
        %464 = vmatpush1.msra.mxu0 0.0
        %465 = vmatprep.subr.mxu0 0.0
        %466 = vmatpush1.msra.mxu0 0.0
        %467 = vmatprep.subr.mxu0 0.0
        %468 = vmatpush1.msra.mxu0 0.0
        %469 = vmatprep.subr.mxu0 0.0
        %470 = vmatpush1.msra.mxu0 0.0
        %471 = vmatprep.mubr.f32.mxu0 0.0
        %472 = vmatmul.mubr.f32.gmra.mrb[0].mxu0 %v405
        %v473 = vpop.f32.mrb[0].mxu0
        %v474 = vadd.f32 0.0, %v473
        %v475 = vpop.f32.mrb[0].mxu0
        %476 = vdwg.mxu0
        %v477 = vld [vmem:[#allocation5] sm:$0xff]
        %479 = vset.pattern.permute.xlu0 0
        %480 = vperm.xlu0 %479, %v387
        %v481 = vpop.permute.xlu0 %480
        %v483 = vmul.f32 %v481, %v477
        %v484 = vadd.f32 %v483, %v474
        %485 = vst.msk [vmem:[#allocation5] sm:$0xff] %vm302, %v484
        %486 = vst.msk [vmem:[#allocation3] sm:$0xff] %vm402, %v384
        %v487 = vld [vmem:[#allocation2] sm:$0xff]
        %v488 = vld [vmem:[%s245] sm:$0xff]
        %v489 = vld [vmem:[%s254] sm:$0xff]
        %491 = vrot.lane.b32.xlu0 %v487, 96
        %v492 = vpop.permute.xlu0 %491
        %494 = vrot.lane.b32.xlu0 %v488, 96
        %v495 = vpop.permute.xlu0 %494
        %v496 = vsel %vm302, %v492, 0
        %v498 = vsel %vm302, %v495, 0
        %500 = vmatprep.subr.mxu0 0.0
        %501 = vmatpush1.xpose.msra.mxu0 %v498
        %502 = vmatprep.subr.mxu0 0.0
        %503 = vmatpush1.xpose.msra.mxu0 0.0
        %504 = vmatprep.subr.mxu0 0.0
        %505 = vmatpush1.xpose.msra.mxu0 0.0
        %506 = vmatprep.subr.mxu0 0.0
        %507 = vmatpush1.xpose.msra.mxu0 0.0
        %508 = vmatprep.subr.mxu0 0.0
        %509 = vmatpush1.xpose.msra.mxu0 0.0
        %510 = vmatprep.subr.mxu0 0.0
        %511 = vmatpush1.xpose.msra.mxu0 0.0
        %512 = vmatprep.subr.mxu0 0.0
        %513 = vmatpush1.xpose.msra.mxu0 0.0
        %514 = vmatprep.subr.mxu0 0.0
        %515 = vmatpush1.xpose.msra.mxu0 0.0
        %516 = vmatprep.subr.mxu0 0.0
        %517 = vmatpush1.xpose.msra.mxu0 0.0
        %518 = vmatprep.subr.mxu0 0.0
        %519 = vmatpush1.xpose.msra.mxu0 0.0
        %520 = vmatprep.subr.mxu0 0.0
        %521 = vmatpush1.xpose.msra.mxu0 0.0
        %522 = vmatprep.subr.mxu0 0.0
        %523 = vmatpush1.xpose.msra.mxu0 0.0
        %524 = vmatprep.subr.mxu0 0.0
        %525 = vmatpush1.xpose.msra.mxu0 0.0
        %526 = vmatprep.subr.mxu0 0.0
        %527 = vmatpush1.xpose.msra.mxu0 0.0
        %528 = vmatprep.subr.mxu0 0.0
        %529 = vmatpush1.xpose.msra.mxu0 0.0
        %530 = vmatprep.subr.mxu0 0.0
        %531 = vmatpush1.xpose.msra.mxu0 0.0
        %532 = vmatprep.subr.mxu0 0.0
        %533 = vmatpush1.xpose.msra.mxu0 0.0
        %534 = vmatprep.subr.mxu0 0.0
        %535 = vmatpush1.xpose.msra.mxu0 0.0
        %536 = vmatprep.subr.mxu0 0.0
        %537 = vmatpush1.xpose.msra.mxu0 0.0
        %538 = vmatprep.subr.mxu0 0.0
        %539 = vmatpush1.xpose.msra.mxu0 0.0
        %540 = vmatprep.subr.mxu0 0.0
        %541 = vmatpush1.xpose.msra.mxu0 0.0
        %542 = vmatprep.subr.mxu0 0.0
        %543 = vmatpush1.xpose.msra.mxu0 0.0
        %544 = vmatprep.subr.mxu0 0.0
        %545 = vmatpush1.xpose.msra.mxu0 0.0
        %546 = vmatprep.subr.mxu0 0.0
        %547 = vmatpush1.xpose.msra.mxu0 0.0
        %548 = vmatprep.subr.mxu0 0.0
        %549 = vmatpush1.xpose.msra.mxu0 0.0
        %550 = vmatprep.subr.mxu0 0.0
        %551 = vmatpush1.xpose.msra.mxu0 0.0
        %552 = vmatprep.subr.mxu0 0.0
        %553 = vmatpush1.xpose.msra.mxu0 0.0
        %554 = vmatprep.subr.mxu0 0.0
        %555 = vmatpush1.xpose.msra.mxu0 0.0
        %556 = vmatprep.subr.mxu0 0.0
        %557 = vmatpush1.xpose.msra.mxu0 0.0
        %558 = vmatprep.subr.mxu0 0.0
        %559 = vmatpush1.xpose.msra.mxu0 0.0
        %560 = vmatprep.subr.mxu0 0.0
        %561 = vmatpush1.xpose.msra.mxu0 0.0
        %562 = vmatprep.subr.mxu0 0.0
        %563 = vmatpush1.xpose.msra.mxu0 0.0
        %564 = vmatprep.mubr.f32.mxu0 0.0
        %565 = vmatmul.mubr.f32.gmra.mrb[0].mxu0 %v496
        %v566 = vpop.f32.mrb[0].mxu0
        %v567 = vadd.f32 0.0, %v566
        %v568 = vpop.f32.mrb[0].mxu0
        %569 = vdwg.mxu0
        %v570 = vld [vmem:[#allocation3] sm:$0xff]
        %v571 = vsel %vm380, %v567, -inf
        %572 = vmax.xlane.f32.xlu0 %v571
        %v573 = vpop.xlane.xlu0 %572
        %v574 = vmax.f32 %v570, %v573
        %v575 = vsub.f32 %v570, %v574
        %v576 = vmul.f32 %v575, 1.442695
        %v577 = vpow.pop %v576
        %579 = vset.pattern.permute.xlu0 1
        %580 = vperm.xlu0 %579, %v574
        %v581 = vpop.permute.xlu0 %580
        %v583 = vsub.f32 %v567, %v581
        %v584 = vmul.f32 %v583, 1.442695
        %v585 = vpow.pop %v584
        %v586 = vld [vmem:[#allocation4] sm:$0xff]
        %v587 = vmul.f32 %v577, %v586
        %v588 = vsel %vm380, %v585, 0.0
        %589 = vadd.xlane.f32.xlu0 %v588
        %v590 = vpop.xlane.xlu0 %589
        %v591 = vadd.f32 %v587, %v590
        %vm592 = vcmask 15368
        %593 = vst.msk [vmem:[#allocation4] sm:$0xff] %vm592, %v591
        %595 = vrot.lane.b32.xlu0 %v489, 96
        %v596 = vpop.permute.xlu0 %595
        %v599 = vsel %vm380, %v585, 0
        %601 = vmatprep.subr.mxu0 0.0
        %602 = vmatpush1.msra.mxu0 %v596
        %603 = vmatprep.subr.mxu0 0.0
        %604 = vmatpush1.msra.mxu0 0.0
        %605 = vmatprep.subr.mxu0 0.0
        %606 = vmatpush1.msra.mxu0 0.0
        %607 = vmatprep.subr.mxu0 0.0
        %608 = vmatpush1.msra.mxu0 0.0
        %609 = vmatprep.subr.mxu0 0.0
        %610 = vmatpush1.msra.mxu0 0.0
        %611 = vmatprep.subr.mxu0 0.0
        %612 = vmatpush1.msra.mxu0 0.0
        %613 = vmatprep.subr.mxu0 0.0
        %614 = vmatpush1.msra.mxu0 0.0
        %615 = vmatprep.subr.mxu0 0.0
        %616 = vmatpush1.msra.mxu0 0.0
        %617 = vmatprep.subr.mxu0 0.0
        %618 = vmatpush1.msra.mxu0 0.0
        %619 = vmatprep.subr.mxu0 0.0
        %620 = vmatpush1.msra.mxu0 0.0
        %621 = vmatprep.subr.mxu0 0.0
        %622 = vmatpush1.msra.mxu0 0.0
        %623 = vmatprep.subr.mxu0 0.0
        %624 = vmatpush1.msra.mxu0 0.0
        %625 = vmatprep.subr.mxu0 0.0
        %626 = vmatpush1.msra.mxu0 0.0
        %627 = vmatprep.subr.mxu0 0.0
        %628 = vmatpush1.msra.mxu0 0.0
        %629 = vmatprep.subr.mxu0 0.0
        %630 = vmatpush1.msra.mxu0 0.0
        %631 = vmatprep.subr.mxu0 0.0
        %632 = vmatpush1.msra.mxu0 0.0
        %633 = vmatprep.subr.mxu0 0.0
        %634 = vmatpush1.msra.mxu0 0.0
        %635 = vmatprep.subr.mxu0 0.0
        %636 = vmatpush1.msra.mxu0 0.0
        %637 = vmatprep.subr.mxu0 0.0
        %638 = vmatpush1.msra.mxu0 0.0
        %639 = vmatprep.subr.mxu0 0.0
        %640 = vmatpush1.msra.mxu0 0.0
        %641 = vmatprep.subr.mxu0 0.0
        %642 = vmatpush1.msra.mxu0 0.0
        %643 = vmatprep.subr.mxu0 0.0
        %644 = vmatpush1.msra.mxu0 0.0
        %645 = vmatprep.subr.mxu0 0.0
        %646 = vmatpush1.msra.mxu0 0.0
        %647 = vmatprep.subr.mxu0 0.0
        %648 = vmatpush1.msra.mxu0 0.0
        %649 = vmatprep.subr.mxu0 0.0
        %650 = vmatpush1.msra.mxu0 0.0
        %651 = vmatprep.subr.mxu0 0.0
        %652 = vmatpush1.msra.mxu0 0.0
        %653 = vmatprep.subr.mxu0 0.0
        %654 = vmatpush1.msra.mxu0 0.0
        %655 = vmatprep.subr.mxu0 0.0
        %656 = vmatpush1.msra.mxu0 0.0
        %657 = vmatprep.subr.mxu0 0.0
        %658 = vmatpush1.msra.mxu0 0.0
        %659 = vmatprep.subr.mxu0 0.0
        %660 = vmatpush1.msra.mxu0 0.0
        %661 = vmatprep.subr.mxu0 0.0
        %662 = vmatpush1.msra.mxu0 0.0
        %663 = vmatprep.subr.mxu0 0.0
        %664 = vmatpush1.msra.mxu0 0.0
        %665 = vmatprep.mubr.f32.mxu0 0.0
        %666 = vmatmul.mubr.f32.gmra.mrb[0].mxu0 %v599
        %v667 = vpop.f32.mrb[0].mxu0
        %v668 = vadd.f32 0.0, %v667
        %v669 = vpop.f32.mrb[0].mxu0
        %670 = vdwg.mxu0
        %v671 = vld [vmem:[#allocation5] sm:$0xff]
        %673 = vset.pattern.permute.xlu0 1
        %674 = vperm.xlu0 %673, %v577
        %v675 = vpop.permute.xlu0 %674
        %v677 = vmul.f32 %v675, %v671
        %679 = vrot.lane.b32.xlu0 %v668, 32
        %v680 = vpop.permute.xlu0 %679
        %v682 = vadd.f32 %v677, %v680
        %vm683 = vcmask 523520
        %684 = vst.msk [vmem:[#allocation5] sm:$0xff] %vm683, %v682
        %685 = vst.msk [vmem:[#allocation3] sm:$0xff] %vm592, %v574
        // Predicated region
        $region49: #{tpu_custom_call.1} parent=31 // pred_check
          %p686 = pneg %p287
        $region50: #{tpu_custom_call.1} parent=31 // pred_check_branch
          %688 = sbr.rel (%p686) target = $region52
        $region51: #{tpu_custom_call.1} parent=31 // pred_region
          %v689 = vld [vmem:[#allocation4] sm:$0xff]
          %v690 = vrcp.pop %v689
          %v691 = vmul.f32 %v689, %v690
          %v692 = vsub.f32 2.0, %v691
          %v693 = vmul.f32 %v690, %v692
          %v694 = vld [vmem:[#allocation5] sm:$0xff]
          %696 = vset.pattern.permute.xlu0 0
          %697 = vperm.xlu0 %696, %v693
          %v698 = vpop.permute.xlu0 %697
          %v700 = vmul.f32 %v694, %v698
          %701 = vst.msk [vmem:[%s286] sm:$0xff] %vm302, %v700
          %v702 = vld [vmem:[#allocation5] sm:$0xff]
          %703 = vset.pattern.permute.xlu0 1
          %704 = vperm.xlu0 %703, %v693
          %v705 = vpop.permute.xlu0 %704
          %v707 = vmul.f32 %v702, %v705
          %708 = vst.msk [vmem:[%s286] sm:$0xff] %vm683, %v707
        $region52: #{tpu_custom_call.1} parent=31 // pred_fallthru
          _
        %s709 = sand.u32 %s136, 1
        %s710 = scalar_lea.sflag [#allocation8], %s709
        %s711 = sand.u32 %s136, 1
        %s712 = smul.addr %s711, 8
        %s713 = scalar_lea.vmem [#allocation12], %s712
        // Predicated region
        $region53: #{tpu_custom_call.1} parent=31 // pred_check
          %p714 = pneg %p146
        $region54: #{tpu_custom_call.1} parent=31 // pred_check_branch
          %716 = sbr.rel (%p714) target = $region56
        $region55: #{tpu_custom_call.1} parent=31 // pred_region
          %s718 = ssub.s32 128, 128
          %719 = vsyncadd %s710, %s718
          %s720 = sadd.s32 %s29, %s28
          %s721 = smul.addr %s720, 128
          %s722 = scalar_lea.hbm %s3, %s721
          %s724 = sshll.u32 %s713, 4
          %s725 = int_to_ptr.vmem [resolvable:$true] %s724
          %727 = dma.vmem_to_hbm [thread:$0]  %s725, 128, %s722, %s710
        $region56: #{tpu_custom_call.1} parent=31 // pred_fallthru
          _
      $region32: #{tpu_custom_call.1} parent=5 // pred_fallthru
        _
      %p728 = scmp.le.s32.totalorder 2, %s18
      // Predicated region
      $region57: #{tpu_custom_call.1} parent=5 // pred_check
        %p729 = pneg %p728
      $region58: #{tpu_custom_call.1} parent=5 // pred_check_branch
        %731 = sbr.rel (%p729) target = $region60
      $region59: #{tpu_custom_call.1} parent=5 // pred_region
        %s732 = ssub.s32 %s18, 2
        // Predicated region
        $region61: #{tpu_custom_call.1} parent=59 // pred_check
          %p733 = pneg %p152
        $region62: #{tpu_custom_call.1} parent=59 // pred_check_branch
          %735 = sbr.rel (%p733) target = $region64
        $region63: #{tpu_custom_call.1} parent=59 // pred_region
          %s736 = sand.u32 %s137, 1
          %s737 = scalar_lea.sflag [#allocation8], %s736
          %s738 = sand.u32 %s137, 1
          %s739 = smul.addr %s738, 8
          %s740 = scalar_lea.vmem [#allocation12], %s739
          %741 = dma.done %s737, 128
        $region64: #{tpu_custom_call.1} parent=59 // pred_fallthru
          _
      $region60: #{tpu_custom_call.1} parent=5 // pred_fallthru
        _
    $region6: #{tpu_custom_call.1} parent=1 // loop_footer
      %s22 = sadd.s32 1, %s18
    $region7: #{tpu_custom_call.1} parent=1 // loop_footer_branch
      %17 = sbr.rel target = $region3
    $region8: #{tpu_custom_call.1} parent=1 // loop_exit
      _
    %742 = vsyncpa [#allocation7], 1
    %s743 = scalar_lea.sflag [#allocation7], 1
    %744 = vsyncpa %s743, 1
    %745 = vsyncpa [#allocation10], 1
    %s746 = scalar_lea.sflag [#allocation10], 1
    %747 = vsyncpa %s746, 1
    %748 = vsyncpa [#allocation8], 1
    %s749 = scalar_lea.sflag [#allocation8], 1
    %750 = vsyncpa %s749, 1

</llo_original>
